<compile_context>
chip_gen: v7x
topology: tpu7x:2x2x1
jax: 0.10.0
libtpu: 0.0.40
codegen_flags: <defaults>
</compile_context>

<pallas_src>
import functools
import math

import jax
import jax.numpy as jnp
from jax import lax
from jax.experimental import pallas as pl
from jax.experimental.pallas import tpu as pltpu


def _pick_tile(n, candidates=(512, 256, 128, 64, 32, 16, 8)):
    """Largest sublane/lane-friendly tile that divides n (falls back to full n)."""
    for c in candidates:
        if n % c == 0:
            return c
    return n


def _vmem_limit_bytes():
    """Generation-aware VMEM budget: ~85% of physical VMEM (v5e/v6e ≈ 108 MiB,
    v7x ≈ 54 MiB), leaving compiler/internal-scratch headroom. Conservative 48 MiB
    fallback if the hardware query is unavailable (still above v5e's 16 MiB default)."""
    cap = None
    try:
        cap = getattr(pltpu.get_tpu_info(), "vmem_capacity_bytes", None)
    except Exception:
        cap = None
    if cap:
        return int(cap * 0.85)
    return 48 * 1024 * 1024


def _attn_tiles(S, E, vmem_budget):
    """Tile picks for kernel 2. tk capped at 256 (fills the 256-deep MXU on v6e/v7x
    and bounds the (TQ, TK) score/p intermediates); tq = largest divisor of S whose
    per-step live set fits the budget, so bigger-VMEM chips naturally get bigger tq."""
    tk = _pick_tile(S, (256, 128, 64, 32, 16, 8))
    resident = 2 * E * E + 4 * E                          # W_out (bf16, 1-buffered) + bias
    for tq in (1024, 512, 256, 128, 64, 32, 16, 8):
        if S % tq:
            continue
        streams = 2 * tq * E * 2 + 2 * 3 * tk * E * 2     # q (2-buf) + k/v (3-buf) bf16
        scratch = tq * E * 4 + 2 * tq * 128 * 4           # acc + lane-padded m/l state
        out_blk = 2 * tq * E * 4                          # double-buffered output block
        interm = 4 * tq * tk * 4                          # a few live (TQ, TK) f32 temps
        if resident + streams + scratch + out_blk + interm <= int(vmem_budget * 0.75):
            return tq, tk
    return _pick_tile(S), tk


# --------------------------------------------------------------------------- #
# Kernel 1: fused QKV projection, written directly in (B, 3, S, E) layout.
# --------------------------------------------------------------------------- #
def _qkv_proj_kernel(x_ref, w_ref, o_ref):
    # x_ref: (TS, E) bf16, w_ref: (E, TN) bf16, o_ref: (TS, TN) bf16
    # TODO(synk): add a K-axis (over E) grid dim + f32 VMEM accumulator for very
    # large embed dims; at module-scale E the full contraction fits one step.
    o_ref[...] = jnp.dot(
        x_ref[...], w_ref[...], preferred_element_type=jnp.float32
    ).astype(o_ref.dtype)


# --------------------------------------------------------------------------- #
# Kernel 2: flash-style attention (online softmax) + output projection.
# --------------------------------------------------------------------------- #
def _flash_attn_kernel(q_ref, k_ref, v_ref, wout_ref, bout_ref, o_ref,
                       m_sc, l_sc, acc_sc, *, n_heads):
    # q_ref: (TQ, E) bf16   k_ref / v_ref: (TK, E) bf16   (head h lives in lanes
    #   [h*d, (h+1)*d); 1/sqrt(d) is already folded into the q weights)
    # wout_ref: (E, E) bf16   bout_ref: (1, E) f32   o_ref: (TQ, E)
    # scratch: m_sc / l_sc (TQ, H) f32, acc_sc (TQ, E) f32
    ki = pl.program_id(2)
    H = n_heads
    d = q_ref.shape[-1] // H

    @pl.when(ki == 0)
    def _init():
        m_sc[...] = jnp.full(m_sc.shape, -jnp.inf, m_sc.dtype)
        l_sc[...] = jnp.zeros(l_sc.shape, l_sc.dtype)
        acc_sc[...] = jnp.zeros(acc_sc.shape, acc_sc.dtype)

    q = q_ref[...]
    k = k_ref[...]
    v = v_ref[...]

    # Static (unrolled) per-head loop: every op is a plain 2-D MXU dot or a static
    # lane slice, and the live intermediates stay (TQ, TK)-sized — independent of H.
    # TODO(synk): optional attention `mask` not implemented (forward uses mask=None).
    for h in range(H):
        lo, hi = h * d, (h + 1) * d
        # Scores with the k-transpose folded into the dot (contract d of both sides).
        s = lax.dot_general(q[:, lo:hi], k[:, lo:hi],
                            dimension_numbers=(((1,), (1,)), ((), ())),
                            preferred_element_type=jnp.float32)        # (TQ, TK) f32

        m_prev = m_sc[:, h:h + 1]                                       # (TQ, 1)
        m_new = jnp.maximum(m_prev, jnp.max(s, axis=-1, keepdims=True))
        alpha = jnp.exp(m_prev - m_new)
        p = jnp.exp(s - m_new)                                          # (TQ, TK)

        l_sc[:, h:h + 1] = alpha * l_sc[:, h:h + 1] + jnp.sum(p, axis=-1, keepdims=True)
        acc_sc[:, lo:hi] = alpha * acc_sc[:, lo:hi] + jnp.dot(
            p.astype(v.dtype), v[:, lo:hi], preferred_element_type=jnp.float32)
        m_sc[:, h:h + 1] = m_new

    @pl.when(ki == pl.num_programs(2) - 1)
    def _finalize():
        inv_l = pl.reciprocal(l_sc[...], approx=True)                   # EUP, ~free
        for h in range(H):
            lo, hi = h * d, (h + 1) * d
            acc_sc[:, lo:hi] = acc_sc[:, lo:hi] * inv_l[:, h:h + 1]
        # Output projection as ONE contraction over the full E = H*d depth: no
        # (H, TQ, E) intermediate and no head reduction on the VPU.
        out = jnp.dot(acc_sc[...].astype(wout_ref.dtype), wout_ref[...],
                      preferred_element_type=jnp.float32)               # (TQ, E) f32
        o_ref[...] = (out + bout_ref[...]).astype(o_ref.dtype)          # lane-dense slab


# --------------------------------------------------------------------------- #
# Wrapper.
# --------------------------------------------------------------------------- #
def multi_head_attention(key, query, value, w_qkv, w_out, b_out, n_heads,
                         mask=None, compute_dtype=jnp.bfloat16):
    """Pallas TPU forward of the reference MultiHeadAttention module.

    key / value are accepted but unused: the reference forward projects only
    `query` through the fused qkv linear.
    """
    del key, value
    if mask is not None:
        # TODO(synk): optional attention `mask` argument not implemented.
        raise NotImplementedError("attention mask is not supported")

    B, S, E = query.shape
    H = n_heads
    d = E // H
    scale = 1.0 / math.sqrt(d)
    vmem_limit = _vmem_limit_bytes()

    # One-time weight transforms (f32, then cast to bf16 MXU operands):
    #   * (E, 3E) -> (3, E, E) so kernel 1 can tile over the q/k/v axis,
    #   * fold 1/sqrt(d) into the q-columns so the flash loop never rescales q.
    w3 = jnp.asarray(w_qkv, jnp.float32).reshape(E, 3, E).transpose(1, 0, 2)
    w3 = w3.at[0].multiply(scale).astype(compute_dtype)        # (3, E, E)
    wout = jnp.asarray(w_out, compute_dtype)                   # (E, E), rows = (h, d)
    bout = jnp.asarray(b_out, jnp.float32).reshape(1, E)       # bias added in f32, 2-D

    x = query.astype(compute_dtype)

    # ---- Kernel 1: fused QKV projection, output directly in (B, 3, S, E) ----
    ts1 = _pick_tile(S)
    tn = _pick_tile(E, (1024, 512, 256, 128))                  # lane-dense N tiles
    n_chunks = E // tn

    qkv = pl.pallas_call(
        _qkv_proj_kernel,
        out_shape=jax.ShapeDtypeStruct((B, 3, S, E), compute_dtype),
        grid_spec=pltpu.PrefetchScalarGridSpec(
            num_scalar_prefetch=0,
            grid=(B, S // ts1, 3, n_chunks),
            in_specs=[
                pl.BlockSpec((None, ts1, E), lambda b, si, j, n: (b, si, 0)),
                pl.BlockSpec((None, E, tn),
                             lambda b, si, j, n: (j, 0, n)),    # weight tile, double-buffered
            ],
            out_specs=pl.BlockSpec((None, None, ts1, tn),
                                   lambda b, si, j, n: (b, j, si, n)),
        ),
        compiler_params=pltpu.CompilerParams(
            dimension_semantics=("parallel", "parallel", "parallel", "parallel"),
            vmem_limit_bytes=vmem_limit),
    )(x, w3)

    # ---- Kernel 2: flash attention + output projection ----
    tq, tk = _attn_tiles(S, E, vmem_limit)
    n_kv = S // tk
    grid = (B, S // tq, n_kv)   # (batch, q-tiles) parallel, kv reduction last

    qkv_block = (None, None, tk, E)
    if n_kv >= 3:
        # Smaller KV tiles -> deeper buffering keeps HBM->VMEM DMAs ahead of the MXU.
        k_spec = pl.BlockSpec(qkv_block, lambda b, qi, ki: (b, 1, ki, 0),
                              pipeline_mode=pl.Buffered(3))
        v_spec = pl.BlockSpec(qkv_block, lambda b, qi, ki: (b, 2, ki, 0),
                              pipeline_mode=pl.Buffered(3))
    else:
        k_spec = pl.BlockSpec(qkv_block, lambda b, qi, ki: (b, 1, ki, 0))
        v_spec = pl.BlockSpec(qkv_block, lambda b, qi, ki: (b, 2, ki, 0))

    # TODO(synk): for very large embed dims (E >= ~4096 on v7x) also tile W_out and
    # the (TQ, E) output slab along E instead of keeping W_out fully resident.
    out = pl.pallas_call(
        functools.partial(_flash_attn_kernel, n_heads=H),
        out_shape=jax.ShapeDtypeStruct((B, S, E), query.dtype),
        grid_spec=pltpu.PrefetchScalarGridSpec(
            num_scalar_prefetch=0,
            grid=grid,
            in_specs=[
                pl.BlockSpec((None, None, tq, E),
                             lambda b, qi, ki: (b, 0, qi, 0)),   # q tile (ki-invariant)
                k_spec,                                           # k tile
                v_spec,                                           # v tile
                pl.BlockSpec((E, E), lambda b, qi, ki: (0, 0),
                             pipeline_mode=pl.Buffered(1)),       # W_out (resident)
                pl.BlockSpec((1, E), lambda b, qi, ki: (0, 0),
                             pipeline_mode=pl.Buffered(1)),       # bias (resident)
            ],
            out_specs=pl.BlockSpec((None, tq, E), lambda b, qi, ki: (b, qi, 0)),
            scratch_shapes=[
                pltpu.VMEM((tq, H), jnp.float32),   # running max  m (per head)
                pltpu.VMEM((tq, H), jnp.float32),   # running sum  l (per head)
                pltpu.VMEM((tq, E), jnp.float32),   # output accumulator (head-concat lanes)
            ],
        ),
        compiler_params=pltpu.CompilerParams(
            dimension_semantics=("parallel", "parallel", "arbitrary"),
            vmem_limit_bytes=vmem_limit),
    )(qkv, qkv, qkv, wout, bout)
    return out


# --------------------------------------------------------------------------- #
# Pure-JAX reference (f32, mirrors the PyTorch module exactly).
# --------------------------------------------------------------------------- #
def _reference(query, w_qkv, w_out, b_out, n_heads):
    B, S, E = query.shape
    d = E // n_heads
    qkv = query @ w_qkv                                     # (B, S, 3E)
    qkv = qkv.reshape(B, S, 3, n_heads, d)
    q, k, v = [jnp.transpose(qkv[:, :, i], (0, 2, 1, 3)) for i in range(3)]  # (B,H,S,d)
    scores = jnp.einsum("bhqd,bhkd->bhqk", q, k) / math.sqrt(d)
    w = jax.nn.softmax(scores, axis=-1)
    out = jnp.einsum("bhqk,bhkd->bhqd", w, v)               # (B, H, S, d)
    out = jnp.transpose(out, (0, 2, 1, 3)).reshape(B, S, E)
    return out @ w_out + b_out[0]


if __name__ == "__main__":
    # Small config consistent with the module: embed_dim=32, n_heads=4.
    B, S, E, H = 2, 8, 32, 4

    root = jax.random.PRNGKey(0)
    k_x, k_qkv, k_out, k_b = jax.random.split(root, 4)

    x = jax.random.normal(k_x, (B, S, E), dtype=jnp.float32)
    lim = 1.0 / math.sqrt(E)
    w_qkv = jax.random.uniform(k_qkv, (E, 3 * E), minval=-lim, maxval=lim,
                               dtype=jnp.float32)
    w_out = jax.random.uniform(k_out, (E, E), minval=-lim, maxval=lim,
                               dtype=jnp.float32)
    b_out = jax.random.uniform(k_b, (1, E), minval=-lim, maxval=lim,
                               dtype=jnp.float32)

    # key/query/value all passed; kernel (like the torch module) only uses query.
    out = multi_head_attention(x, x, x, w_qkv, w_out, b_out, n_heads=H)
    out = jax.block_until_ready(out)

    ref = _reference(x, w_qkv, w_out, b_out, n_heads=H)
    assert out.shape == (B, S, E)
    # bf16 matmul operands (f32 accumulation) -> looser tolerance than pure-f32 math.
    assert jnp.allclose(out, ref, atol=3e-2, rtol=3e-2), "mismatch vs JAX reference"

    print("KERNEL_OK")
</pallas_src>

<mosaic_0001>
module attributes {stable_mosaic.version = 11 : i64} {
  func.func @_qkv_proj_kernel(%arg0: i32, %arg1: i32, %arg2: i32, %arg3: i32, %arg4: memref<1x8x32xbf16, #tpu.memory_space<vmem>>, %arg5: memref<1x32x32xbf16, #tpu.memory_space<vmem>>, %arg6: memref<1x1x8x32xbf16, #tpu.memory_space<vmem>>) attributes {dimension_semantics = [#tpu.dimension_semantics<parallel>, #tpu.dimension_semantics<parallel>, #tpu.dimension_semantics<parallel>, #tpu.dimension_semantics<parallel>], iteration_bounds = array<i64: 2, 1, 3, 1>, scalar_prefetch = 0 : i64, scratch_operands = 0 : i64, tpu.core_type = #tpu.core_type<tc>, window_params = [{transform_indices = @transform_0, window_bounds = array<i64: 1, 8, 32>}, {transform_indices = @transform_1, window_bounds = array<i64: 1, 32, 32>}, {transform_indices = @transform_2, window_bounds = array<i64: 1, 1, 8, 32>}]} {
    %c0 = arith.constant 0 : index
    %c0_0 = arith.constant 0 : index
    %c0_1 = arith.constant 0 : index
    %0 = vector.load %arg4[%c0, %c0_0, %c0_1] : memref<1x8x32xbf16, #tpu.memory_space<vmem>>, vector<1x8x32xbf16>
    %1 = vector.shape_cast %0 : vector<1x8x32xbf16> to vector<8x32xbf16>
    %c0_2 = arith.constant 0 : index
    %c0_3 = arith.constant 0 : index
    %c0_4 = arith.constant 0 : index
    %2 = vector.load %arg5[%c0_2, %c0_3, %c0_4] : memref<1x32x32xbf16, #tpu.memory_space<vmem>>, vector<1x32x32xbf16>
    %3 = vector.shape_cast %2 : vector<1x32x32xbf16> to vector<32x32xbf16>
    %cst = arith.constant dense<0.000000e+00> : vector<8x32xf32>
    %4 = tpu.matmul %1, %3, %cst {dimension_numbers = #tpu.dot_dimension_numbers<[1], [0], [0], [1], [0, 0, 1, 1], [], []>} : vector<8x32xbf16>, vector<32x32xbf16>, vector<8x32xf32> -> vector<8x32xf32>
    %5 = arith.truncf %4 : vector<8x32xf32> to vector<8x32xbf16>
    %c0_5 = arith.constant 0 : index
    %c0_6 = arith.constant 0 : index
    %c0_7 = arith.constant 0 : index
    %c0_8 = arith.constant 0 : index
    %6 = vector.load %arg6[%c0_5, %c0_6, %c0_7, %c0_8] : memref<1x1x8x32xbf16, #tpu.memory_space<vmem>>, vector<1x1x8x32xbf16>
    %7 = vector.shape_cast %6 : vector<1x1x8x32xbf16> to vector<8x32xbf16>
    %8 = vector.shape_cast %5 : vector<8x32xbf16> to vector<1x1x8x32xbf16>
    tpu.vector_store %arg6[%c0_5, %c0_6, %c0_7, %c0_8], %8 {strides = array<i32>} : memref<1x1x8x32xbf16, #tpu.memory_space<vmem>>, vector<1x1x8x32xbf16>,
    return
  }
  func.func @transform_0(%arg0: i32, %arg1: i32, %arg2: i32, %arg3: i32) -> (i32, i32, i32) {
    %c0_i32 = arith.constant 0 : i32
    %c0_i32_0 = arith.constant 0 : i32
    return %arg0, %arg1, %c0_i32 : i32, i32, i32
  }
  func.func @transform_1(%arg0: i32, %arg1: i32, %arg2: i32, %arg3: i32) -> (i32, i32, i32) {
    %c0_i32 = arith.constant 0 : i32
    %c0_i32_0 = arith.constant 0 : i32
    return %arg2, %c0_i32, %arg3 : i32, i32, i32
  }
  func.func @transform_2(%arg0: i32, %arg1: i32, %arg2: i32, %arg3: i32) -> (i32, i32, i32, i32) {
    %c0_i32 = arith.constant 0 : i32
    return %arg0, %arg2, %arg1, %arg3 : i32, i32, i32, i32
  }
}

</mosaic_0001>

<llo_original>
// kernel: tpu_custom_call.1
$region0: #{tpu_custom_call.1}
  #allocation0 [shape = 'u32[]', space=smem, size = 0x4, offset = 0x4, fixed_abs, tag = 'smem constant byte address 0x4 - core index']
  #allocation1 [shape = 'u32[144,128]{1,0:T(1,128)}', space=vmem, size = 0x12000, scoped, tag = 'internal scratch']
  %s0 = inlined_call_operand.hbm [shape: bf16[2,8,32], index: 0, kind: input, shape index: {}]
  %s1 = inlined_call_operand.hbm [shape: bf16[3,32,32], index: 1, kind: input, shape index: {}]
  %s2 = inlined_call_operand.hbm [shape: bf16[2,3,8,32], index: 2, kind: output, shape index: {}]
  %s3 = sld [smem:[#allocation0]]
  $region49: #{tpu_custom_call.1} parent=0
    _
  %s5 = ssub.s32 1, %s3
  %s6 = scalar_select 0, %s5, %s3
  $region1: #{tpu_custom_call.1} parent=0
    #allocation2 [shape = 'u8[4096]{0}', space=vmem, size = 0x1000, scoped, tag = 'input window, operand 0']
    #allocation3 [shape = 's32[2]{0}', space=sflag, size = 0x8, scoped, tag = 'scoped memory for tpu_custom_call.1']
    #allocation4 [shape = 's32[2]{0}', space=sflag, size = 0x8, scoped, tag = 'scoped memory for tpu_custom_call.1']
    #allocation5 [shape = 'u8[16384]{0}', space=vmem, size = 0x4000, scoped, tag = 'input window, operand 1']
    #allocation6 [shape = 's32[2]{0}', space=sflag, size = 0x8, scoped, tag = 'scoped memory for tpu_custom_call.1']
    #allocation7 [shape = 'u8[4096]{0}', space=vmem, size = 0x1000, scoped, tag = 'output window, operand 0']
    %7 = vsyncpa [#allocation3], 0
    %s8 = scalar_lea.sflag [#allocation3], 1
    %9 = vsyncpa %s8, 0
    %10 = vsyncpa [#allocation6], 0
    %s11 = scalar_lea.sflag [#allocation6], 1
    %12 = vsyncpa %s11, 0
    %13 = vsyncpa [#allocation4], 0
    %s14 = scalar_lea.sflag [#allocation4], 1
    %15 = vsyncpa %s14, 0
    loop: start=0, step=1, limit=8
    $region2: #{tpu_custom_call.1} parent=1 // loop_pre_header
      _
    $region3: #{tpu_custom_call.1} parent=1 // loop_header
      %s17 = sphi 0, %s21
      %p18 = scmp.ge.s32.totalorder %s17, 8
      %s24 = sphi 0, %s50
      %s25 = sphi 0, %s46
      %s26 = sphi 0, %s42
      %s27 = sphi 0, %s38
      %s28 = sphi 0, %s24
      %s29 = sphi 0, %s25
      %s30 = sphi 0, %s26
      %s31 = sphi 0, %s27
      %s32 = sphi 0, %s28
      %s33 = sphi 0, %s29
      %s34 = sphi 0, %s30
      %s35 = sphi 0, %s31
      %s55 = sphi 0, %s57
      %s58 = sphi 0, %s55
      %s59 = sphi 0, %s58
      %s75 = sphi 0, %s59
      %s83 = sphi 0, %s85
      %s86 = sphi 0, %s83
      %s87 = sphi 0, %s86
      %s103 = sphi 0, %s87
      %s115 = sphi 0, %s117
      %s118 = sphi 0, %s115
      %s119 = sphi 0, %s118
      %s135 = sphi 0, %s119
    $region4: #{tpu_custom_call.1} parent=1 // loop_header_branch
      %20 = sbr.rel (%p18) target = $region8
    $region5: #{tpu_custom_call.1} parent=1 // loop_body
      %s22 = ssub.s32 %s17, 1
      %s23 = ssub.s32 %s17, 2
      %s36 = sadd.s32 1, %s27
      %p37 = scmp.ge.s32.totalorder %s36, 1
      %s38 = scalar_select %p37, 0, %s36
      %s39 = sadd.s32 1, %s26
      %s40 = scalar_select %p37, %s39, %s26
      %p41 = scmp.ge.s32.totalorder %s40, 3
      %s42 = scalar_select %p41, 0, %s40
      %s43 = sadd.s32 1, %s25
      %s44 = scalar_select %p41, %s43, %s25
      %p45 = scmp.ge.s32.totalorder %s44, 1
      %s46 = scalar_select %p45, 0, %s44
      %s47 = sadd.s32 1, %s24
      %s48 = scalar_select %p45, %s47, %s24
      %p49 = scmp.ge.s32.totalorder %s48, 2
      %s50 = scalar_select %p49, 0, %s48
      %s51 = ssub.s32 %s24, %s50
      %s52 = ssub.s32 %s25, %s46
      %s53 = sor.u32 %s51, %s52
      %p54 = scmp.eq.s32.totalorder %s53, 0
      %s56 = sadd.s32 %s55, 1
      %s57 = scalar_select %p54, %s55, %s56
      %p60 = pneg %p54
      %p61 = scmp.eq.s32.totalorder %s17, 5
      %p62 = por %p60, %p61
      %p63 = scmp.ne.s32.totalorder %s55, %s58
      %p64 = scmp.eq.s32.totalorder %s17, 0
      %p65 = por %p63, %p64
      %p66 = scmp.ne.s32.totalorder %s55, %s58
      %p67 = scmp.eq.s32.totalorder %s22, 5
      %p68 = por %p66, %p67
      %p69 = scmp.ne.s32.totalorder %s58, %s59
      %p70 = scmp.eq.s32.totalorder %s22, 0
      %p71 = por %p69, %p70
      %p72 = scmp.ne.s32.totalorder %s58, %s59
      %p73 = scmp.eq.s32.totalorder %s23, 5
      %p74 = por %p72, %p73
      %p76 = scmp.ne.s32.totalorder %s59, %s75
      %p77 = scmp.eq.s32.totalorder %s23, 0
      %p78 = por %p76, %p77
      %s79 = ssub.s32 %s26, %s42
      %s80 = ssub.s32 %s27, %s38
      %s81 = sor.u32 %s79, %s80
      %p82 = scmp.eq.s32.totalorder %s81, 0
      %s84 = sadd.s32 %s83, 1
      %s85 = scalar_select %p82, %s83, %s84
      %p88 = pneg %p82
      %p89 = scmp.eq.s32.totalorder %s17, 5
      %p90 = por %p88, %p89
      %p91 = scmp.ne.s32.totalorder %s83, %s86
      %p92 = scmp.eq.s32.totalorder %s17, 0
      %p93 = por %p91, %p92
      %p94 = scmp.ne.s32.totalorder %s83, %s86
      %p95 = scmp.eq.s32.totalorder %s22, 5
      %p96 = por %p94, %p95
      %p97 = scmp.ne.s32.totalorder %s86, %s87
      %p98 = scmp.eq.s32.totalorder %s22, 0
      %p99 = por %p97, %p98
      %p100 = scmp.ne.s32.totalorder %s86, %s87
      %p101 = scmp.eq.s32.totalorder %s23, 5
      %p102 = por %p100, %p101
      %p104 = scmp.ne.s32.totalorder %s87, %s103
      %p105 = scmp.eq.s32.totalorder %s23, 0
      %p106 = por %p104, %p105
      %s107 = ssub.s32 %s24, %s50
      %s108 = ssub.s32 %s26, %s42
      %s109 = sor.u32 %s107, %s108
      %s110 = ssub.s32 %s25, %s46
      %s111 = sor.u32 %s109, %s110
      %s112 = ssub.s32 %s27, %s38
      %s113 = sor.u32 %s111, %s112
      %p114 = scmp.eq.s32.totalorder %s113, 0
      %s116 = sadd.s32 %s115, 1
      %s117 = scalar_select %p114, %s115, %s116
      %p120 = pneg %p114
      %p121 = scmp.eq.s32.totalorder %s17, 5
      %p122 = por %p120, %p121
      %p123 = scmp.ne.s32.totalorder %s115, %s118
      %p124 = scmp.eq.s32.totalorder %s17, 0
      %p125 = por %p123, %p124
      %p126 = scmp.ne.s32.totalorder %s115, %s118
      %p127 = scmp.eq.s32.totalorder %s22, 5
      %p128 = por %p126, %p127
      %p129 = scmp.ne.s32.totalorder %s118, %s119
      %p130 = scmp.eq.s32.totalorder %s22, 0
      %p131 = por %p129, %p130
      %p132 = scmp.ne.s32.totalorder %s118, %s119
      %p133 = scmp.eq.s32.totalorder %s23, 5
      %p134 = por %p132, %p133
      %p136 = scmp.ne.s32.totalorder %s119, %s135
      %p137 = scmp.eq.s32.totalorder %s23, 0
      %p138 = por %p136, %p137
      %p139 = scmp.le.s32.totalorder 1, %s17
      %p140 = scmp.lt.s32.totalorder %s17, 7
      %p141 = pnand %p139, %p140
      %p142 = pneg %p141
      // Predicated region
      $region9: #{tpu_custom_call.1} parent=5 // pred_check
        _
      $region10: #{tpu_custom_call.1} parent=5 // pred_check_branch
        %144 = sbr.rel (%p141) target = $region12
      $region11: #{tpu_custom_call.1} parent=5 // pred_region
        %s145 = ssub.s32 %s17, 1
      $region12: #{tpu_custom_call.1} parent=5 // pred_fallthru
        _
      %p146 = scmp.lt.s32.totalorder %s17, 6
      // Predicated region
      $region13: #{tpu_custom_call.1} parent=5 // pred_check
        %p147 = pneg %p146
      $region14: #{tpu_custom_call.1} parent=5 // pred_check_branch
        %149 = sbr.rel (%p147) target = $region16
      $region15: #{tpu_custom_call.1} parent=5 // pred_region
        // Predicated region
        $region17: #{tpu_custom_call.1} parent=15 // pred_check
          %p150 = pneg %p65
        $region18: #{tpu_custom_call.1} parent=15 // pred_check_branch
          %152 = sbr.rel (%p150) target = $region20
        $region19: #{tpu_custom_call.1} parent=15 // pred_region
          %s153 = sand.u32 %s55, 1
          %s154 = scalar_lea.sflag [#allocation3], %s153
          %s155 = sand.u32 %s55, 1
          %s156 = smul.addr %s155, 4
          %s157 = scalar_lea.vmem [#allocation2], %s156
          %s159 = ssub.s32 64, 64
          %160 = vsyncadd %s154, %s159
          %s161 = sadd.s32 %s25, %s24
          %s162 = smul.addr %s161, 64
          %s163 = scalar_lea.hbm %s0, %s162
          %s165 = sshll.u32 %s157, 4
          %s166 = int_to_ptr.vmem [resolvable:$true] %s165
          %168 = dma.hbm_to_vmem [thread:$0]  %s163, 64, %s166, %s154
        $region20: #{tpu_custom_call.1} parent=15 // pred_fallthru
          _
        // Predicated region
        $region21: #{tpu_custom_call.1} parent=15 // pred_check
          %p169 = pneg %p93
        $region22: #{tpu_custom_call.1} parent=15 // pred_check_branch
          %171 = sbr.rel (%p169) target = $region24
        $region23: #{tpu_custom_call.1} parent=15 // pred_region
          %s172 = sand.u32 %s83, 1
          %s173 = scalar_lea.sflag [#allocation6], %s172
          %s174 = sand.u32 %s83, 1
          %s175 = smul.addr %s174, 16
          %s176 = scalar_lea.vmem [#allocation5], %s175
          %s178 = ssub.s32 256, 256
          %179 = vsyncadd %s173, %s178
          %s180 = smul.addr %s26, 4
          %s181 = sadd.s32 %s27, %s180
          %s182 = smul.addr %s181, 64
          %s183 = scalar_lea.hbm %s1, %s182
          %s184 = sshll.u32 %s176, 4
          %s185 = int_to_ptr.vmem [resolvable:$true] %s184
          %190 = dma.hbm_to_vmem [thread:$0]  %s183, 256, %s185, %s173, 64, 64, 4
        $region24: #{tpu_custom_call.1} parent=15 // pred_fallthru
          _
      $region16: #{tpu_custom_call.1} parent=5 // pred_fallthru
        _
      %p191 = scmp.le.s32.totalorder 1, %s17
      %p192 = scmp.lt.s32.totalorder %s17, 7
      %p193 = pnand %p191, %p192
      %p194 = pneg %p193
      // Predicated region
      $region25: #{tpu_custom_call.1} parent=5 // pred_check
        _
      $region26: #{tpu_custom_call.1} parent=5 // pred_check_branch
        %196 = sbr.rel (%p193) target = $region28
      $region27: #{tpu_custom_call.1} parent=5 // pred_region
        %s197 = ssub.s32 %s17, 1
        %s198 = sand.u32 %s58, 1
        %s199 = scalar_lea.sflag [#allocation3], %s198
        %s200 = sand.u32 %s58, 1
        %s201 = smul.addr %s200, 4
        %s202 = scalar_lea.vmem [#allocation2], %s201
        // Predicated region
        $region29: #{tpu_custom_call.1} parent=27 // pred_check
          %p203 = pneg %p71
        $region30: #{tpu_custom_call.1} parent=27 // pred_check_branch
          %205 = sbr.rel (%p203) target = $region32
        $region31: #{tpu_custom_call.1} parent=27 // pred_region
          %206 = dma.done %s199, 64
        $region32: #{tpu_custom_call.1} parent=27 // pred_fallthru
          _
        %s207 = sand.u32 %s86, 1
        %s208 = scalar_lea.sflag [#allocation6], %s207
        %s209 = sand.u32 %s86, 1
        %s210 = smul.addr %s209, 16
        %s211 = scalar_lea.vmem [#allocation5], %s210
        // Predicated region
        $region33: #{tpu_custom_call.1} parent=27 // pred_check
          %p212 = pneg %p99
        $region34: #{tpu_custom_call.1} parent=27 // pred_check_branch
          %214 = sbr.rel (%p212) target = $region36
        $region35: #{tpu_custom_call.1} parent=27 // pred_region
          %215 = dma.done %s208, 256
        $region36: #{tpu_custom_call.1} parent=27 // pred_fallthru
          _
        %s216 = sand.u32 %s58, 1
        %s217 = scalar_lea.sflag [#allocation3], %s216
        %s218 = sand.u32 %s58, 1
        %s219 = smul.addr %s218, 4
        %s220 = scalar_lea.vmem [#allocation2], %s219
        %p221 = pneg %p71
        %p222 = pneg %p68
        %s223 = sand.u32 %s86, 1
        %s224 = scalar_lea.sflag [#allocation6], %s223
        %s225 = sand.u32 %s86, 1
        %s226 = smul.addr %s225, 16
        %s227 = scalar_lea.vmem [#allocation5], %s226
        %p228 = pneg %p99
        %p229 = pneg %p96
        %p230 = pneg %p131
        %p231 = pneg %p128
        %s232 = sand.u32 %s118, 1
        %s233 = scalar_lea.sflag [#allocation4], %s232
        %s234 = sand.u32 %s118, 1
        %s235 = smul.addr %s234, 4
        %s236 = scalar_lea.vmem [#allocation7], %s235
        %v238 = vld [vmem:[%s202] sm:$0xf]
        %v239 = vld [vmem:[%s211] sm:$0xf]
        %v240 = vld [vmem:[%s211 + $0x4] sm:$0xf]
        %v241 = vld [vmem:[%s211 + $0x8] sm:$0xf]
        %v242 = vld [vmem:[%s211 + $0xc] sm:$0xf]
        %v247 = vunpack.c.l.b16 %v239
        %v248 = vunpack.c.l.b16 %v240
        %v249 = vunpack.c.l.b16 %v241
        %v250 = vunpack.c.l.b16 %v242
        %v251 = vpack.c.b16 %v248, %v247
        %v252 = vpack.c.b16 %v250, %v249
        %vm255 = vcmask 261120
        %v257 = vsel %vm255, %v238, 0
        %259 = vmatprep.subr.bf16.mxu0 0
        %260 = vmatpush1.bf16.msra.mxu0 %v251
        %261 = vmatprep.subr.bf16.mxu0 0
        %262 = vmatpush1.bf16.msra.mxu0 %v252
        %263 = vmatprep.subr.bf16.mxu0 0
        %264 = vmatpush1.bf16.msra.mxu0 0
        %265 = vmatprep.subr.bf16.mxu0 0
        %266 = vmatpush1.bf16.msra.mxu0 0
        %267 = vmatprep.subr.bf16.mxu0 0
        %268 = vmatpush1.bf16.msra.mxu0 0
        %269 = vmatprep.subr.bf16.mxu0 0
        %270 = vmatpush1.bf16.msra.mxu0 0
        %271 = vmatprep.subr.bf16.mxu0 0
        %272 = vmatpush1.bf16.msra.mxu0 0
        %273 = vmatprep.subr.bf16.mxu0 0
        %274 = vmatpush1.bf16.msra.mxu0 0
        %275 = vmatprep.subr.bf16.mxu0 0
        %276 = vmatpush1.bf16.msra.mxu0 0
        %277 = vmatprep.subr.bf16.mxu0 0
        %278 = vmatpush1.bf16.msra.mxu0 0
        %279 = vmatprep.subr.bf16.mxu0 0
        %280 = vmatpush1.bf16.msra.mxu0 0
        %281 = vmatprep.subr.bf16.mxu0 0
        %282 = vmatpush1.bf16.msra.mxu0 0
        %283 = vmatprep.subr.bf16.mxu0 0
        %284 = vmatpush1.bf16.msra.mxu0 0
        %285 = vmatprep.subr.bf16.mxu0 0
        %286 = vmatpush1.bf16.msra.mxu0 0
        %287 = vmatprep.subr.bf16.mxu0 0
        %288 = vmatpush1.bf16.msra.mxu0 0
        %289 = vmatprep.subr.bf16.mxu0 0
        %290 = vmatpush1.bf16.msra.mxu0 0
        %291 = vmatprep.mubr.bf16.mxu0 0
        %292 = vmatmul.mubr.bf16.gmra.mrb[0].mxu0 %v257
        %v293 = vpop.f32.mrb[0].mxu0
        %v294 = vadd.f32 0.0, %v293
        %v295 = vpop.f32.mrb[0].mxu0
        %v296 = vpop.f32.mrb[0].mxu0
        %v297 = vpop.f32.mrb[0].mxu0
        %298 = vdwg.mxu0
        %v299 = vpack.c.bf16 %v294, %v294
        %vm300 = vcmask 257024
        %301 = vst.msk [vmem:[%s236] sm:$0xf] %vm300, %v299
        %s302 = sand.u32 %s118, 1
        %s303 = scalar_lea.sflag [#allocation4], %s302
        %s304 = sand.u32 %s118, 1
        %s305 = smul.addr %s304, 4
        %s306 = scalar_lea.vmem [#allocation7], %s305
        // Predicated region
        $region37: #{tpu_custom_call.1} parent=27 // pred_check
          %p307 = pneg %p128
        $region38: #{tpu_custom_call.1} parent=27 // pred_check_branch
          %309 = sbr.rel (%p307) target = $region40
        $region39: #{tpu_custom_call.1} parent=27 // pred_region
          %s311 = ssub.s32 64, 64
          %312 = vsyncadd %s303, %s311
          %s313 = sadd.s32 %s31, %s29
          %s314 = sadd.s32 %s313, %s30
          %s315 = smul.addr %s28, 3
          %s316 = sadd.s32 %s314, %s315
          %s317 = smul.addr %s316, 64
          %s318 = scalar_lea.hbm %s2, %s317
          %s320 = sshll.u32 %s306, 4
          %s321 = int_to_ptr.vmem [resolvable:$true] %s320
          %323 = dma.vmem_to_hbm [thread:$0]  %s321, 64, %s318, %s303
        $region40: #{tpu_custom_call.1} parent=27 // pred_fallthru
          _
      $region28: #{tpu_custom_call.1} parent=5 // pred_fallthru
        _
      %p324 = scmp.le.s32.totalorder 2, %s17
      // Predicated region
      $region41: #{tpu_custom_call.1} parent=5 // pred_check
        %p325 = pneg %p324
      $region42: #{tpu_custom_call.1} parent=5 // pred_check_branch
        %327 = sbr.rel (%p325) target = $region44
      $region43: #{tpu_custom_call.1} parent=5 // pred_region
        %s328 = ssub.s32 %s17, 2
        // Predicated region
        $region45: #{tpu_custom_call.1} parent=43 // pred_check
          %p329 = pneg %p134
        $region46: #{tpu_custom_call.1} parent=43 // pred_check_branch
          %331 = sbr.rel (%p329) target = $region48
        $region47: #{tpu_custom_call.1} parent=43 // pred_region
          %s332 = sand.u32 %s119, 1
          %s333 = scalar_lea.sflag [#allocation4], %s332
          %s334 = sand.u32 %s119, 1
          %s335 = smul.addr %s334, 4
          %s336 = scalar_lea.vmem [#allocation7], %s335
          %337 = dma.done %s333, 64
        $region48: #{tpu_custom_call.1} parent=43 // pred_fallthru
          _
      $region44: #{tpu_custom_call.1} parent=5 // pred_fallthru
        _
    $region6: #{tpu_custom_call.1} parent=1 // loop_footer
      %s21 = sadd.s32 1, %s17
    $region7: #{tpu_custom_call.1} parent=1 // loop_footer_branch
      %16 = sbr.rel target = $region3
    $region8: #{tpu_custom_call.1} parent=1 // loop_exit
      _
    %338 = vsyncpa [#allocation3], 1
    %s339 = scalar_lea.sflag [#allocation3], 1
    %340 = vsyncpa %s339, 1
    %341 = vsyncpa [#allocation6], 1
    %s342 = scalar_lea.sflag [#allocation6], 1
    %343 = vsyncpa %s342, 1
    %344 = vsyncpa [#allocation4], 1
    %s345 = scalar_lea.sflag [#allocation4], 1
    %346 = vsyncpa %s345, 1

</llo_original>
